<compile_context>
chip_gen: v6e
topology: v6e:2x2x1
jax: 0.10.0
libtpu: 0.0.40
codegen_flags: <defaults>
</compile_context>

<pallas_src>
import functools

import jax
import jax.numpy as jnp
from jax import lax
from jax.experimental import pallas as pl
from jax.experimental.pallas import tpu as pltpu


# ---------------------------------------------------------------------------
# Prologue kernel: 1x1-conv Q/K/V projections (channel matmuls in (C, N)).
# Runs once per element, instead of n_k (q) / n_q (k, v) times inside the
# flash loop as in the previous version.
# ---------------------------------------------------------------------------
def _qkv_proj_kernel(x_ref, y_ref, wq_ref, wk_ref, wv_ref,
                     q_ref, k_ref, v_ref, *, compute_dtype):
    x = x_ref[0].astype(compute_dtype)              # (C, T)
    y = y_ref[0].astype(compute_dtype)              # (C, T)
    wq = wq_ref[...]                                # (C, C), already compute_dtype
    wk = wk_ref[...]
    wv = wv_ref[...]
    # MXU accumulates in f32 internally; emit directly in the attention compute
    # dtype -> no extra cast pass and half the HBM bytes for the flash kernel.
    q_ref[0] = jnp.dot(wq, x, preferred_element_type=q_ref.dtype)
    k_ref[0] = jnp.dot(wk, y, preferred_element_type=k_ref.dtype)
    v_ref[0] = jnp.dot(wv, y, preferred_element_type=v_ref.dtype)


# ---------------------------------------------------------------------------
# Flash-attention kernel over pre-projected q/k/v (online softmax on key axis).
# ---------------------------------------------------------------------------
def _flash_attn_kernel(gamma_ref, x_ref, q_ref, k_ref, v_ref, o_ref,
                       m_sc, l_sc, acc_sc, *, compute_dtype, bf16_probs):
    ki = pl.program_id(2)
    nk = pl.num_programs(2)

    @pl.when(ki == 0)
    def _():
        m_sc[...] = jnp.full_like(m_sc, -jnp.inf)
        l_sc[...] = jnp.zeros_like(l_sc)
        acc_sc[...] = jnp.zeros_like(acc_sc)

    q = q_ref[0]                                    # (C, TQ) compute_dtype
    k = k_ref[0]                                    # (C, TK) compute_dtype
    v = v_ref[0]                                    # (C, TK) compute_dtype

    # energy transposed: e_t[m, n] = sum_c k[c, m] * q[c, n] -> (TK, TQ).
    # Keys on sublanes / queries on lanes so all softmax stats are (1, TQ)
    # and broadcast for free against the (C, TQ) accumulator.
    e_t = lax.dot_general(k, q, (((0,), (0,)), ((), ())),
                          preferred_element_type=jnp.float32)

    m_prev = m_sc[...]                                              # (1, TQ)
    m_new = jnp.maximum(m_prev, jnp.max(e_t, axis=0, keepdims=True))
    alpha = jnp.exp(m_prev - m_new)                                 # (1, TQ)

    if bf16_probs:
        # EUP-bound regime (small C): bf16 exp, stats stay f32.
        p = jnp.exp((e_t - m_new).astype(jnp.bfloat16))             # (TK, TQ)
        l_sc[...] = alpha * l_sc[...] + jnp.sum(p, axis=0, keepdims=True,
                                                dtype=jnp.float32)
        p_mxu = p
    else:
        p = jnp.exp(e_t - m_new)                                    # (TK, TQ) f32
        l_sc[...] = alpha * l_sc[...] + jnp.sum(p, axis=0, keepdims=True)
        p_mxu = p.astype(compute_dtype)

    acc_sc[...] = alpha * acc_sc[...] + jnp.dot(
        v, p_mxu, preferred_element_type=jnp.float32)               # (C, TQ)
    m_sc[...] = m_new

    @pl.when(ki == nk - 1)
    def _():
        l = l_sc[...]
        r = pl.reciprocal(l, approx=True)          # EUP vrcp
        r = r * (2.0 - l * r)                      # one Newton step -> ~f32 accuracy
        out = acc_sc[...] * r                      # (C, TQ)
        gamma = gamma_ref[0]
        o_ref[0] = (gamma * out + x_ref[0].astype(jnp.float32)).astype(o_ref.dtype)


# ---------------------------------------------------------------------------
# Tiling / VMEM helpers.
# ---------------------------------------------------------------------------
def _pick_tile(n, preferred):
    for t in (preferred, 512, 384, 256, 128):
        if t <= n and n % t == 0 and t % 128 == 0:
            return t
    return n  # full axis is always a legal block dim


def _vmem_cap_bytes():
    # Per-generation clamp: ~120 MiB usable on v5e/v6e, ~56 MiB on v7x.
    try:
        cap = int(pltpu.get_tpu_info().vmem_capacity_bytes)
    except Exception:
        cap = 64 << 20
    return max(cap - (8 << 20), 32 << 20)   # leave Mosaic internal headroom


def _clamp_vmem(est_bytes):
    return int(max(32 << 20, min(est_bytes, _vmem_cap_bytes())))


def _proj_vmem_estimate(C, T, act_bytes, cd_bytes):
    db = 2  # double-buffered pipeline copies
    inputs = db * (2 * C * T * act_bytes + 3 * C * C * cd_bytes)
    outputs = db * 3 * C * T * cd_bytes
    live = 4 * 5 * C * T
    return int(1.3 * (inputs + outputs + live)) + (4 << 20)


def _attn_vmem_estimate(C, TQ, TK, act_bytes, cd_bytes, out_bytes):
    db = 2
    inputs = db * (C * TQ * act_bytes + C * TQ * cd_bytes + 2 * C * TK * cd_bytes)
    outputs = db * C * TQ * out_bytes
    scratch = (2 * TQ + C * TQ) * 4
    live = 4 * (2 * TQ * TK + 2 * C * TQ)
    return int(1.3 * (inputs + outputs + scratch + live)) + (4 << 20)


# ---------------------------------------------------------------------------
# Wrapper.
# ---------------------------------------------------------------------------
def cross_attention_block(x_nchw, y_nchw, wq, wk, wv, gamma, *,
                          compute_dtype=jnp.bfloat16, tq=512, tk=512,
                          bf16_probs=False):
    """x_nchw, y_nchw: (B, C, H, W); wq/wk/wv: (C_out, C_in); gamma: (1,) f32.

    bf16_probs: compute softmax probabilities in bf16 (worthwhile on v6e/v7x
    when C <= 128 where the EUP binds; keep False on v5e).
    """
    B, C, H, W = x_nchw.shape
    C_out = wq.shape[0]
    assert C_out == C, "residual requires out_channels == in_channels"
    N = H * W
    compute_dtype = jnp.dtype(compute_dtype)

    # NCHW -> (B, C, N): contiguous reshape only, no transpose.
    x_cn = x_nchw.reshape(B, C, N)
    y_cn = y_nchw.reshape(B, C, N)

    # Cast weights to compute_dtype ONCE in the wrapper (no per-step casts).
    wq_c = wq.astype(compute_dtype)
    wk_c = wk.astype(compute_dtype)
    wv_c = wv.astype(compute_dtype)
    gamma_f32 = gamma.astype(jnp.float32)

    act_bytes = jnp.dtype(x_nchw.dtype).itemsize
    cd_bytes = compute_dtype.itemsize
    out_bytes = act_bytes

    # ---- 1) Q/K/V projection prologue -------------------------------------
    TP = _pick_tile(N, max(tq, tk))
    n_p = N // TP

    proj_grid = pltpu.PrefetchScalarGridSpec(
        num_scalar_prefetch=0,
        grid=(B, n_p),
        in_specs=[
            pl.BlockSpec((1, C, TP), lambda b, t: (b, 0, t)),   # x
            pl.BlockSpec((1, C, TP), lambda b, t: (b, 0, t)),   # y
            pl.BlockSpec((C, C), lambda b, t: (0, 0)),          # Wq (resident)
            pl.BlockSpec((C, C), lambda b, t: (0, 0)),          # Wk
            pl.BlockSpec((C, C), lambda b, t: (0, 0)),          # Wv
        ],
        out_specs=[pl.BlockSpec((1, C, TP), lambda b, t: (b, 0, t))] * 3,
    )
    qkv_shape = jax.ShapeDtypeStruct((B, C, N), compute_dtype)
    q_cn, k_cn, v_cn = pl.pallas_call(
        functools.partial(_qkv_proj_kernel, compute_dtype=compute_dtype),
        out_shape=(qkv_shape, qkv_shape, qkv_shape),
        grid_spec=proj_grid,
        compiler_params=pltpu.CompilerParams(
            dimension_semantics=("parallel", "parallel"),
            vmem_limit_bytes=_clamp_vmem(
                _proj_vmem_estimate(C, TP, act_bytes, cd_bytes))),
    )(x_cn, y_cn, wq_c, wk_c, wv_c)

    # ---- 2) Flash attention over pre-projected q/k/v ----------------------
    TQ = _pick_tile(N, tq)
    TK = _pick_tile(N, tk)
    # v7x has 2 TensorCores: make sure the parallel axes expose >= 2 indices.
    if B * (N // TQ) < 2 and TQ > 128:
        TQ = _pick_tile(N, max(128, TQ // 2))
    n_q = N // TQ
    n_k = N // TK

    attn_grid = pltpu.PrefetchScalarGridSpec(
        num_scalar_prefetch=0,
        grid=(B, n_q, n_k),
        in_specs=[
            pl.BlockSpec(memory_space=pltpu.MemorySpace.SMEM),            # gamma
            pl.BlockSpec((1, C, TQ), lambda b, qi, ki: (b, 0, qi)),       # x (residual)
            pl.BlockSpec((1, C, TQ), lambda b, qi, ki: (b, 0, qi)),       # q tile
            pl.BlockSpec((1, C, TK), lambda b, qi, ki: (b, 0, ki)),       # k tile
            pl.BlockSpec((1, C, TK), lambda b, qi, ki: (b, 0, ki)),       # v tile
        ],
        out_specs=pl.BlockSpec((1, C, TQ), lambda b, qi, ki: (b, 0, qi)),
        scratch_shapes=[
            pltpu.VMEM((1, TQ), jnp.float32),    # running max
            pltpu.VMEM((1, TQ), jnp.float32),    # running sum
            pltpu.VMEM((C, TQ), jnp.float32),    # output accumulator
        ],
    )

    out_cn = pl.pallas_call(
        functools.partial(_flash_attn_kernel, compute_dtype=compute_dtype,
                          bf16_probs=bool(bf16_probs)),
        out_shape=jax.ShapeDtypeStruct((B, C, N), x_nchw.dtype),
        grid_spec=attn_grid,
        compiler_params=pltpu.CompilerParams(
            dimension_semantics=("parallel", "parallel", "arbitrary"),
            vmem_limit_bytes=_clamp_vmem(
                _attn_vmem_estimate(C, TQ, TK, act_bytes, cd_bytes, out_bytes))),
    )(gamma_f32, x_cn, q_cn, k_cn, v_cn)

    return out_cn.reshape(B, C_out, H, W)


# ---------------------------------------------------------------------------
# Pure-JAX reference (mirrors the PyTorch forward).
# ---------------------------------------------------------------------------
def _reference(x, y, wq, wk, wv, gamma):
    B, C, H, W = x.shape
    N = H * W

    def conv1x1(inp, w):  # (B,C,H,W) x (Cout,Cin) -> (B,Cout,N)
        return jnp.einsum('oc,bcn->bon', w, inp.reshape(B, C, N))

    q = jnp.transpose(conv1x1(x, wq), (0, 2, 1))        # (B, N, Cout)
    k = conv1x1(y, wk)                                  # (B, Cout, N)
    v = conv1x1(y, wv)                                  # (B, Cout, N)
    energy = jnp.einsum('bnc,bcm->bnm', q, k)           # (B, N, N)
    attn = jax.nn.softmax(energy, axis=-1)
    out = jnp.einsum('bcm,bnm->bcn', v, attn).reshape(B, -1, H, W)
    return gamma[0] * out + x


if __name__ == "__main__":
    key = jax.random.PRNGKey(0)
    B, C, H, W = 2, 4, 16, 16
    kx, ky, kq, kk, kv = jax.random.split(key, 5)

    x = jax.random.normal(kx, (B, C, H, W), dtype=jnp.float32)
    y = jax.random.normal(ky, (B, C, H, W), dtype=jnp.float32)

    # Conv2d(C, C, 1, bias=False) weights squeezed to (C_out, C_in).
    bound = 1.0 / (C ** 0.5)
    wq = jax.random.uniform(kq, (C, C), jnp.float32, -bound, bound)
    wk = jax.random.uniform(kk, (C, C), jnp.float32, -bound, bound)
    wv = jax.random.uniform(kv, (C, C), jnp.float32, -bound, bound)
    gamma = jnp.array([0.1], dtype=jnp.float32)

    ref = _reference(x, y, wq, wk, wv, gamma)

    # f32 MXU operands (tight check) — 128x128 tiles exercise the online softmax
    # (attention grid = (2 batch, 2 q-tiles, 2 k-tiles)).
    out_f32 = jax.block_until_ready(
        cross_attention_block(x, y, wq, wk, wv, gamma,
                              compute_dtype=jnp.float32, tq=128, tk=128))
    assert out_f32.shape == (B, C, H, W)
    assert jnp.allclose(out_f32, ref, atol=1e-3, rtol=1e-3), "f32 path mismatch"

    # Default fast path: bf16 projections / MXU operands, f32 accumulation +
    # f32 softmax stats and epilogue.
    out_bf16 = jax.block_until_ready(
        cross_attention_block(x, y, wq, wk, wv, gamma, tq=128, tk=128))
    assert out_bf16.shape == (B, C, H, W)
    assert jnp.allclose(out_bf16, ref, atol=3e-2, rtol=3e-2), "bf16 path mismatch"

    print("KERNEL_OK")
</pallas_src>

<mosaic_0001>
module attributes {stable_mosaic.version = 11 : i64} {
  func.func @_qkv_proj_kernel(%arg0: i32, %arg1: i32, %arg2: memref<1x4x128xf32, #tpu.memory_space<vmem>>, %arg3: memref<1x4x128xf32, #tpu.memory_space<vmem>>, %arg4: memref<4x4xf32, #tpu.memory_space<vmem>>, %arg5: memref<4x4xf32, #tpu.memory_space<vmem>>, %arg6: memref<4x4xf32, #tpu.memory_space<vmem>>, %arg7: memref<1x4x128xf32, #tpu.memory_space<vmem>>, %arg8: memref<1x4x128xf32, #tpu.memory_space<vmem>>, %arg9: memref<1x4x128xf32, #tpu.memory_space<vmem>>) attributes {dimension_semantics = [#tpu.dimension_semantics<parallel>, #tpu.dimension_semantics<parallel>], iteration_bounds = array<i64: 2, 2>, scalar_prefetch = 0 : i64, scratch_operands = 0 : i64, tpu.core_type = #tpu.core_type<tc>, window_params = [{transform_indices = @transform_0, window_bounds = array<i64: 1, 4, 128>}, {transform_indices = @transform_1, window_bounds = array<i64: 1, 4, 128>}, {pipeline_mode = #tpu.pipeline_mode<synchronous>, transform_indices = @transform_2, window_bounds = array<i64: 4, 4>}, {pipeline_mode = #tpu.pipeline_mode<synchronous>, transform_indices = @transform_3, window_bounds = array<i64: 4, 4>}, {pipeline_mode = #tpu.pipeline_mode<synchronous>, transform_indices = @transform_4, window_bounds = array<i64: 4, 4>}, {transform_indices = @transform_5, window_bounds = array<i64: 1, 4, 128>}, {transform_indices = @transform_6, window_bounds = array<i64: 1, 4, 128>}, {transform_indices = @transform_7, window_bounds = array<i64: 1, 4, 128>}]} {
    %c0 = arith.constant 0 : index
    %c0_0 = arith.constant 0 : index
    %c0_1 = arith.constant 0 : index
    %0 = vector.load %arg2[%c0, %c0_0, %c0_1] : memref<1x4x128xf32, #tpu.memory_space<vmem>>, vector<1x4x128xf32>
    %1 = vector.shape_cast %0 : vector<1x4x128xf32> to vector<4x128xf32>
    %c0_2 = arith.constant 0 : index
    %c0_3 = arith.constant 0 : index
    %c0_4 = arith.constant 0 : index
    %2 = vector.load %arg3[%c0_2, %c0_3, %c0_4] : memref<1x4x128xf32, #tpu.memory_space<vmem>>, vector<1x4x128xf32>
    %3 = vector.shape_cast %2 : vector<1x4x128xf32> to vector<4x128xf32>
    %c0_5 = arith.constant 0 : index
    %c0_6 = arith.constant 0 : index
    %4 = vector.load %arg4[%c0_5, %c0_6] : memref<4x4xf32, #tpu.memory_space<vmem>>, vector<4x4xf32>
    %c0_7 = arith.constant 0 : index
    %c0_8 = arith.constant 0 : index
    %5 = vector.load %arg5[%c0_7, %c0_8] : memref<4x4xf32, #tpu.memory_space<vmem>>, vector<4x4xf32>
    %c0_9 = arith.constant 0 : index
    %c0_10 = arith.constant 0 : index
    %6 = vector.load %arg6[%c0_9, %c0_10] : memref<4x4xf32, #tpu.memory_space<vmem>>, vector<4x4xf32>
    %cst = arith.constant dense<0.000000e+00> : vector<4x128xf32>
    %7 = tpu.matmul %4, %1, %cst {dimension_numbers = #tpu.dot_dimension_numbers<[1], [0], [0], [1], [0, 0, 1, 1], [], []>} : vector<4x4xf32>, vector<4x128xf32>, vector<4x128xf32> -> vector<4x128xf32>
    %c0_11 = arith.constant 0 : index
    %c0_12 = arith.constant 0 : index
    %c0_13 = arith.constant 0 : index
    %8 = vector.load %arg7[%c0_11, %c0_12, %c0_13] : memref<1x4x128xf32, #tpu.memory_space<vmem>>, vector<1x4x128xf32>
    %9 = vector.shape_cast %8 : vector<1x4x128xf32> to vector<4x128xf32>
    %10 = vector.shape_cast %7 : vector<4x128xf32> to vector<1x4x128xf32>
    tpu.vector_store %arg7[%c0_11, %c0_12, %c0_13], %10 {strides = array<i32>} : memref<1x4x128xf32, #tpu.memory_space<vmem>>, vector<1x4x128xf32>,
    %cst_14 = arith.constant dense<0.000000e+00> : vector<4x128xf32>
    %11 = tpu.matmul %5, %3, %cst_14 {dimension_numbers = #tpu.dot_dimension_numbers<[1], [0], [0], [1], [0, 0, 1, 1], [], []>} : vector<4x4xf32>, vector<4x128xf32>, vector<4x128xf32> -> vector<4x128xf32>
    %c0_15 = arith.constant 0 : index
    %c0_16 = arith.constant 0 : index
    %c0_17 = arith.constant 0 : index
    %12 = vector.load %arg8[%c0_15, %c0_16, %c0_17] : memref<1x4x128xf32, #tpu.memory_space<vmem>>, vector<1x4x128xf32>
    %13 = vector.shape_cast %12 : vector<1x4x128xf32> to vector<4x128xf32>
    %14 = vector.shape_cast %11 : vector<4x128xf32> to vector<1x4x128xf32>
    tpu.vector_store %arg8[%c0_15, %c0_16, %c0_17], %14 {strides = array<i32>} : memref<1x4x128xf32, #tpu.memory_space<vmem>>, vector<1x4x128xf32>,
    %cst_18 = arith.constant dense<0.000000e+00> : vector<4x128xf32>
    %15 = tpu.matmul %6, %3, %cst_18 {dimension_numbers = #tpu.dot_dimension_numbers<[1], [0], [0], [1], [0, 0, 1, 1], [], []>} : vector<4x4xf32>, vector<4x128xf32>, vector<4x128xf32> -> vector<4x128xf32>
    %c0_19 = arith.constant 0 : index
    %c0_20 = arith.constant 0 : index
    %c0_21 = arith.constant 0 : index
    %16 = vector.load %arg9[%c0_19, %c0_20, %c0_21] : memref<1x4x128xf32, #tpu.memory_space<vmem>>, vector<1x4x128xf32>
    %17 = vector.shape_cast %16 : vector<1x4x128xf32> to vector<4x128xf32>
    %18 = vector.shape_cast %15 : vector<4x128xf32> to vector<1x4x128xf32>
    tpu.vector_store %arg9[%c0_19, %c0_20, %c0_21], %18 {strides = array<i32>} : memref<1x4x128xf32, #tpu.memory_space<vmem>>, vector<1x4x128xf32>,
    return
  }
  func.func @transform_0(%arg0: i32, %arg1: i32) -> (i32, i32, i32) {
    %c0_i32 = arith.constant 0 : i32
    %c0_i32_0 = arith.constant 0 : i32
    return %arg0, %c0_i32, %arg1 : i32, i32, i32
  }
  func.func @transform_1(%arg0: i32, %arg1: i32) -> (i32, i32, i32) {
    %c0_i32 = arith.constant 0 : i32
    %c0_i32_0 = arith.constant 0 : i32
    return %arg0, %c0_i32, %arg1 : i32, i32, i32
  }
  func.func @transform_2(%arg0: i32, %arg1: i32) -> (i32, i32) {
    %c0_i32 = arith.constant 0 : i32
    %c0_i32_0 = arith.constant 0 : i32
    %c0_i32_1 = arith.constant 0 : i32
    return %c0_i32, %c0_i32_0 : i32, i32
  }
  func.func @transform_3(%arg0: i32, %arg1: i32) -> (i32, i32) {
    %c0_i32 = arith.constant 0 : i32
    %c0_i32_0 = arith.constant 0 : i32
    %c0_i32_1 = arith.constant 0 : i32
    return %c0_i32, %c0_i32_0 : i32, i32
  }
  func.func @transform_4(%arg0: i32, %arg1: i32) -> (i32, i32) {
    %c0_i32 = arith.constant 0 : i32
    %c0_i32_0 = arith.constant 0 : i32
    %c0_i32_1 = arith.constant 0 : i32
    return %c0_i32, %c0_i32_0 : i32, i32
  }
  func.func @transform_5(%arg0: i32, %arg1: i32) -> (i32, i32, i32) {
    %c0_i32 = arith.constant 0 : i32
    %c0_i32_0 = arith.constant 0 : i32
    return %arg0, %c0_i32, %arg1 : i32, i32, i32
  }
  func.func @transform_6(%arg0: i32, %arg1: i32) -> (i32, i32, i32) {
    %c0_i32 = arith.constant 0 : i32
    %c0_i32_0 = arith.constant 0 : i32
    return %arg0, %c0_i32, %arg1 : i32, i32, i32
  }
  func.func @transform_7(%arg0: i32, %arg1: i32) -> (i32, i32, i32) {
    %c0_i32 = arith.constant 0 : i32
    %c0_i32_0 = arith.constant 0 : i32
    return %arg0, %c0_i32, %arg1 : i32, i32, i32
  }
}

</mosaic_0001>

<llo_original>
// kernel: tpu_custom_call.1
$region0: #{tpu_custom_call.1}
  #allocation0 [shape = 'u32[]', space=smem, size = 0x4, offset = 0x4, fixed_abs, tag = 'smem constant byte address 0x4 - core index']
  #allocation1 [shape = 'u32[144,128]{1,0:T(1,128)}', space=vmem, size = 0x12000, scoped, tag = 'internal scratch']
  %s0 = inlined_call_operand.hbm [shape: f32[2,4,256], index: 0, kind: input, shape index: {}]
  %s1 = inlined_call_operand.hbm [shape: f32[2,4,256], index: 1, kind: input, shape index: {}]
  %s2 = inlined_call_operand.hbm [shape: f32[4,4], index: 2, kind: input, shape index: {}]
  %s3 = inlined_call_operand.vmem [shape: f32[4,4], index: 3, kind: input, shape index: {}]
  %s4 = inlined_call_operand.hbm [shape: f32[4,4], index: 4, kind: input, shape index: {}]
  %s5 = inlined_call_operand.hbm [shape: f32[2,4,256], index: 5, kind: output, shape index: {0}]
  %s6 = inlined_call_operand.hbm [shape: f32[2,4,256], index: 6, kind: output, shape index: {1}]
  %s7 = inlined_call_operand.hbm [shape: f32[2,4,256], index: 7, kind: output, shape index: {2}]
  %8 = xla_tuple %s5, %s6, %s7
  %s9 = sld [smem:[#allocation0]]
  $region85: #{tpu_custom_call.1} parent=0
    _
  %s11 = ssub.s32 1, %s9
  %s12 = scalar_select 0, %s11, %s9
  $region1: #{tpu_custom_call.1} parent=0
    #allocation2 [shape = 'u8[4096]{0}', space=vmem, size = 0x1000, scoped, tag = 'input window, operand 0']
    #allocation3 [shape = 's32[2]{0}', space=sflag, size = 0x8, scoped, tag = 'scoped memory for tpu_custom_call.1']
    #allocation4 [shape = 's32[2]{0}', space=sflag, size = 0x8, scoped, tag = 'scoped memory for tpu_custom_call.1']
    #allocation5 [shape = 'u8[4096]{0}', space=vmem, size = 0x1000, scoped, tag = 'input window, operand 1']
    #allocation6 [shape = 's32[2]{0}', space=sflag, size = 0x8, scoped, tag = 'scoped memory for tpu_custom_call.1']
    #allocation7 [shape = 'u8[2048]{0}', space=vmem, size = 0x800, scoped, tag = 'input window, operand 2, single buffered']
    #allocation8 [shape = 'u8[2048]{0}', space=vmem, size = 0x800, scoped, tag = 'input window, operand 4, single buffered']
    #allocation9 [shape = 's32[1]{0}', space=sflag, size = 0x4, scoped, tag = 'scoped memory for tpu_custom_call.1']
    #allocation10 [shape = 'u8[4096]{0}', space=vmem, size = 0x1000, scoped, tag = 'output window, operand 0']
    #allocation11 [shape = 'u8[4096]{0}', space=vmem, size = 0x1000, scoped, tag = 'output window, operand 1']
    #allocation12 [shape = 's32[2]{0}', space=sflag, size = 0x8, scoped, tag = 'scoped memory for tpu_custom_call.1']
    #allocation13 [shape = 'u8[4096]{0}', space=vmem, size = 0x1000, scoped, tag = 'output window, operand 2']
    %13 = vsyncpa [#allocation3], 0
    %s14 = scalar_lea.sflag [#allocation3], 1
    %15 = vsyncpa %s14, 0
    %16 = vsyncpa [#allocation6], 0
    %s17 = scalar_lea.sflag [#allocation6], 1
    %18 = vsyncpa %s17, 0
    %19 = vsyncpa [#allocation9], 0
    %20 = vsyncpa [#allocation4], 0
    %s21 = scalar_lea.sflag [#allocation4], 1
    %22 = vsyncpa %s21, 0
    %23 = vsyncpa [#allocation12], 0
    %s24 = scalar_lea.sflag [#allocation12], 1
    %25 = vsyncpa %s24, 0
    loop: start=0, step=1, limit=6
    $region2: #{tpu_custom_call.1} parent=1 // loop_pre_header
      _
    $region3: #{tpu_custom_call.1} parent=1 // loop_header
      %s27 = sphi 0, %s31
      %p28 = scmp.ge.s32.totalorder %s27, 6
      %s34 = sphi 0, %s46
      %s35 = sphi 0, %s42
      %s36 = sphi 0, %s34
      %s37 = sphi 0, %s35
      %s38 = sphi 0, %s36
      %s39 = sphi 0, %s37
      %s51 = sphi 0, %s53
      %s54 = sphi 0, %s51
      %s55 = sphi 0, %s54
      %s71 = sphi 0, %s55
      %s79 = sphi 0, %s81
      %s82 = sphi 0, %s79
      %s83 = sphi 0, %s82
      %s99 = sphi 0, %s83
      %s103 = sphi 0, %s103
      %s105 = sphi 0, %s103
      %s106 = sphi 0, %s105
      %s120 = sphi 0, %s106
      %s124 = sphi 0, %s124
      %s126 = sphi 0, %s124
      %s127 = sphi 0, %s126
      %s141 = sphi 0, %s127
      %s145 = sphi 0, %s145
      %s147 = sphi 0, %s145
      %s148 = sphi 0, %s147
      %s162 = sphi 0, %s148
      %s170 = sphi 0, %s172
      %s173 = sphi 0, %s170
      %s174 = sphi 0, %s173
      %s190 = sphi 0, %s174
      %s198 = sphi 0, %s200
      %s201 = sphi 0, %s198
      %s202 = sphi 0, %s201
      %s218 = sphi 0, %s202
      %s226 = sphi 0, %s228
      %s229 = sphi 0, %s226
      %s230 = sphi 0, %s229
      %s246 = sphi 0, %s230
    $region4: #{tpu_custom_call.1} parent=1 // loop_header_branch
      %30 = sbr.rel (%p28) target = $region8
    $region5: #{tpu_custom_call.1} parent=1 // loop_body
      %s32 = ssub.s32 %s27, 1
      %s33 = ssub.s32 %s27, 2
      %s40 = sadd.s32 1, %s35
      %p41 = scmp.ge.s32.totalorder %s40, 2
      %s42 = scalar_select %p41, 0, %s40
      %s43 = sadd.s32 1, %s34
      %s44 = scalar_select %p41, %s43, %s34
      %p45 = scmp.ge.s32.totalorder %s44, 2
      %s46 = scalar_select %p45, 0, %s44
      %s47 = ssub.s32 %s34, %s46
      %s48 = ssub.s32 %s35, %s42
      %s49 = sor.u32 %s47, %s48
      %p50 = scmp.eq.s32.totalorder %s49, 0
      %s52 = sadd.s32 %s51, 1
      %s53 = scalar_select %p50, %s51, %s52
      %p56 = pneg %p50
      %p57 = scmp.eq.s32.totalorder %s27, 3
      %p58 = por %p56, %p57
      %p59 = scmp.ne.s32.totalorder %s51, %s54
      %p60 = scmp.eq.s32.totalorder %s27, 0
      %p61 = por %p59, %p60
      %p62 = scmp.ne.s32.totalorder %s51, %s54
      %p63 = scmp.eq.s32.totalorder %s32, 3
      %p64 = por %p62, %p63
      %p65 = scmp.ne.s32.totalorder %s54, %s55
      %p66 = scmp.eq.s32.totalorder %s32, 0
      %p67 = por %p65, %p66
      %p68 = scmp.ne.s32.totalorder %s54, %s55
      %p69 = scmp.eq.s32.totalorder %s33, 3
      %p70 = por %p68, %p69
      %p72 = scmp.ne.s32.totalorder %s55, %s71
      %p73 = scmp.eq.s32.totalorder %s33, 0
      %p74 = por %p72, %p73
      %s75 = ssub.s32 %s34, %s46
      %s76 = ssub.s32 %s35, %s42
      %s77 = sor.u32 %s75, %s76
      %p78 = scmp.eq.s32.totalorder %s77, 0
      %s80 = sadd.s32 %s79, 1
      %s81 = scalar_select %p78, %s79, %s80
      %p84 = pneg %p78
      %p85 = scmp.eq.s32.totalorder %s27, 3
      %p86 = por %p84, %p85
      %p87 = scmp.ne.s32.totalorder %s79, %s82
      %p88 = scmp.eq.s32.totalorder %s27, 0
      %p89 = por %p87, %p88
      %p90 = scmp.ne.s32.totalorder %s79, %s82
      %p91 = scmp.eq.s32.totalorder %s32, 3
      %p92 = por %p90, %p91
      %p93 = scmp.ne.s32.totalorder %s82, %s83
      %p94 = scmp.eq.s32.totalorder %s32, 0
      %p95 = por %p93, %p94
      %p96 = scmp.ne.s32.totalorder %s82, %s83
      %p97 = scmp.eq.s32.totalorder %s33, 3
      %p98 = por %p96, %p97
      %p100 = scmp.ne.s32.totalorder %s83, %s99
      %p101 = scmp.eq.s32.totalorder %s33, 0
      %p102 = por %p100, %p101
      %s104 = sadd.s32 %s103, 1
      %p107 = scmp.eq.s32.totalorder %s27, 3
      %p108 = scmp.ne.s32.totalorder %s103, %s105
      %p109 = scmp.eq.s32.totalorder %s27, 0
      %p110 = por %p108, %p109
      %p111 = scmp.ne.s32.totalorder %s103, %s105
      %p112 = scmp.eq.s32.totalorder %s32, 3
      %p113 = por %p111, %p112
      %p114 = scmp.ne.s32.totalorder %s105, %s106
      %p115 = scmp.eq.s32.totalorder %s32, 0
      %p116 = por %p114, %p115
      %p117 = scmp.ne.s32.totalorder %s105, %s106
      %p118 = scmp.eq.s32.totalorder %s33, 3
      %p119 = por %p117, %p118
      %p121 = scmp.ne.s32.totalorder %s106, %s120
      %p122 = scmp.eq.s32.totalorder %s33, 0
      %p123 = por %p121, %p122
      %s125 = sadd.s32 %s124, 1
      %p128 = scmp.eq.s32.totalorder %s27, 3
      %p129 = scmp.ne.s32.totalorder %s124, %s126
      %p130 = scmp.eq.s32.totalorder %s27, 0
      %p131 = por %p129, %p130
      %p132 = scmp.ne.s32.totalorder %s124, %s126
      %p133 = scmp.eq.s32.totalorder %s32, 3
      %p134 = por %p132, %p133
      %p135 = scmp.ne.s32.totalorder %s126, %s127
      %p136 = scmp.eq.s32.totalorder %s32, 0
      %p137 = por %p135, %p136
      %p138 = scmp.ne.s32.totalorder %s126, %s127
      %p139 = scmp.eq.s32.totalorder %s33, 3
      %p140 = por %p138, %p139
      %p142 = scmp.ne.s32.totalorder %s127, %s141
      %p143 = scmp.eq.s32.totalorder %s33, 0
      %p144 = por %p142, %p143
      %s146 = sadd.s32 %s145, 1
      %p149 = scmp.eq.s32.totalorder %s27, 3
      %p150 = scmp.ne.s32.totalorder %s145, %s147
      %p151 = scmp.eq.s32.totalorder %s27, 0
      %p152 = por %p150, %p151
      %p153 = scmp.ne.s32.totalorder %s145, %s147
      %p154 = scmp.eq.s32.totalorder %s32, 3
      %p155 = por %p153, %p154
      %p156 = scmp.ne.s32.totalorder %s147, %s148
      %p157 = scmp.eq.s32.totalorder %s32, 0
      %p158 = por %p156, %p157
      %p159 = scmp.ne.s32.totalorder %s147, %s148
      %p160 = scmp.eq.s32.totalorder %s33, 3
      %p161 = por %p159, %p160
      %p163 = scmp.ne.s32.totalorder %s148, %s162
      %p164 = scmp.eq.s32.totalorder %s33, 0
      %p165 = por %p163, %p164
      %s166 = ssub.s32 %s34, %s46
      %s167 = ssub.s32 %s35, %s42
      %s168 = sor.u32 %s166, %s167
      %p169 = scmp.eq.s32.totalorder %s168, 0
      %s171 = sadd.s32 %s170, 1
      %s172 = scalar_select %p169, %s170, %s171
      %p175 = pneg %p169
      %p176 = scmp.eq.s32.totalorder %s27, 3
      %p177 = por %p175, %p176
      %p178 = scmp.ne.s32.totalorder %s170, %s173
      %p179 = scmp.eq.s32.totalorder %s27, 0
      %p180 = por %p178, %p179
      %p181 = scmp.ne.s32.totalorder %s170, %s173
      %p182 = scmp.eq.s32.totalorder %s32, 3
      %p183 = por %p181, %p182
      %p184 = scmp.ne.s32.totalorder %s173, %s174
      %p185 = scmp.eq.s32.totalorder %s32, 0
      %p186 = por %p184, %p185
      %p187 = scmp.ne.s32.totalorder %s173, %s174
      %p188 = scmp.eq.s32.totalorder %s33, 3
      %p189 = por %p187, %p188
      %p191 = scmp.ne.s32.totalorder %s174, %s190
      %p192 = scmp.eq.s32.totalorder %s33, 0
      %p193 = por %p191, %p192
      %s194 = ssub.s32 %s34, %s46
      %s195 = ssub.s32 %s35, %s42
      %s196 = sor.u32 %s194, %s195
      %p197 = scmp.eq.s32.totalorder %s196, 0
      %s199 = sadd.s32 %s198, 1
      %s200 = scalar_select %p197, %s198, %s199
      %p203 = pneg %p197
      %p204 = scmp.eq.s32.totalorder %s27, 3
      %p205 = por %p203, %p204
      %p206 = scmp.ne.s32.totalorder %s198, %s201
      %p207 = scmp.eq.s32.totalorder %s27, 0
      %p208 = por %p206, %p207
      %p209 = scmp.ne.s32.totalorder %s198, %s201
      %p210 = scmp.eq.s32.totalorder %s32, 3
      %p211 = por %p209, %p210
      %p212 = scmp.ne.s32.totalorder %s201, %s202
      %p213 = scmp.eq.s32.totalorder %s32, 0
      %p214 = por %p212, %p213
      %p215 = scmp.ne.s32.totalorder %s201, %s202
      %p216 = scmp.eq.s32.totalorder %s33, 3
      %p217 = por %p215, %p216
      %p219 = scmp.ne.s32.totalorder %s202, %s218
      %p220 = scmp.eq.s32.totalorder %s33, 0
      %p221 = por %p219, %p220
      %s222 = ssub.s32 %s34, %s46
      %s223 = ssub.s32 %s35, %s42
      %s224 = sor.u32 %s222, %s223
      %p225 = scmp.eq.s32.totalorder %s224, 0
      %s227 = sadd.s32 %s226, 1
      %s228 = scalar_select %p225, %s226, %s227
      %p231 = pneg %p225
      %p232 = scmp.eq.s32.totalorder %s27, 3
      %p233 = por %p231, %p232
      %p234 = scmp.ne.s32.totalorder %s226, %s229
      %p235 = scmp.eq.s32.totalorder %s27, 0
      %p236 = por %p234, %p235
      %p237 = scmp.ne.s32.totalorder %s226, %s229
      %p238 = scmp.eq.s32.totalorder %s32, 3
      %p239 = por %p237, %p238
      %p240 = scmp.ne.s32.totalorder %s229, %s230
      %p241 = scmp.eq.s32.totalorder %s32, 0
      %p242 = por %p240, %p241
      %p243 = scmp.ne.s32.totalorder %s229, %s230
      %p244 = scmp.eq.s32.totalorder %s33, 3
      %p245 = por %p243, %p244
      %p247 = scmp.ne.s32.totalorder %s230, %s246
      %p248 = scmp.eq.s32.totalorder %s33, 0
      %p249 = por %p247, %p248
      %p250 = scmp.le.s32.totalorder 1, %s27
      %p251 = scmp.lt.s32.totalorder %s27, 5
      %p252 = pnand %p250, %p251
      %p253 = pneg %p252
      // Predicated region
      $region9: #{tpu_custom_call.1} parent=5 // pred_check
        _
      $region10: #{tpu_custom_call.1} parent=5 // pred_check_branch
        %255 = sbr.rel (%p252) target = $region12
      $region11: #{tpu_custom_call.1} parent=5 // pred_region
        %s256 = ssub.s32 %s27, 1
        // Predicated region
        $region13: #{tpu_custom_call.1} parent=11 // pred_check
          %p257 = pneg %p116
        $region14: #{tpu_custom_call.1} parent=11 // pred_check_branch
          %259 = sbr.rel (%p257) target = $region16
        $region15: #{tpu_custom_call.1} parent=11 // pred_region
          %s261 = ssub.s32 64, 64
          %262 = vsyncadd [#allocation6], %s261
          %s264 = sshll.u32 [#allocation7], 4
          %s265 = int_to_ptr.vmem [resolvable:$true] %s264
          %267 = dma.hbm_to_vmem [thread:$0]  %s2, 64, %s265, [#allocation6]
        $region16: #{tpu_custom_call.1} parent=11 // pred_fallthru
          _
        // Predicated region
        $region17: #{tpu_custom_call.1} parent=11 // pred_check
          %p268 = pneg %p137
        $region18: #{tpu_custom_call.1} parent=11 // pred_check_branch
          %270 = sbr.rel (%p268) target = $region20
        $region19: #{tpu_custom_call.1} parent=11 // pred_region
          _
        $region20: #{tpu_custom_call.1} parent=11 // pred_fallthru
          _
        // Predicated region
        $region21: #{tpu_custom_call.1} parent=11 // pred_check
          %p271 = pneg %p158
        $region22: #{tpu_custom_call.1} parent=11 // pred_check_branch
          %273 = sbr.rel (%p271) target = $region24
        $region23: #{tpu_custom_call.1} parent=11 // pred_region
          %s275 = ssub.s32 64, 64
          %276 = vsyncadd [#allocation9], %s275
          %s278 = sshll.u32 [#allocation8], 4
          %s279 = int_to_ptr.vmem [resolvable:$true] %s278
          %281 = dma.hbm_to_vmem [thread:$0]  %s4, 64, %s279, [#allocation9]
        $region24: #{tpu_custom_call.1} parent=11 // pred_fallthru
          _
      $region12: #{tpu_custom_call.1} parent=5 // pred_fallthru
        _
      %p282 = scmp.lt.s32.totalorder %s27, 4
      // Predicated region
      $region25: #{tpu_custom_call.1} parent=5 // pred_check
        %p283 = pneg %p282
      $region26: #{tpu_custom_call.1} parent=5 // pred_check_branch
        %285 = sbr.rel (%p283) target = $region28
      $region27: #{tpu_custom_call.1} parent=5 // pred_region
        // Predicated region
        $region29: #{tpu_custom_call.1} parent=27 // pred_check
          %p286 = pneg %p61
        $region30: #{tpu_custom_call.1} parent=27 // pred_check_branch
          %288 = sbr.rel (%p286) target = $region32
        $region31: #{tpu_custom_call.1} parent=27 // pred_region
          %s289 = sand.u32 %s51, 1
          %s290 = scalar_lea.sflag [#allocation3], %s289
          %s291 = sand.u32 %s51, 1
          %s292 = smul.addr %s291, 4
          %s293 = scalar_lea.vmem [#allocation2], %s292
          %s295 = ssub.s32 64, 64
          %296 = vsyncadd %s290, %s295
          %s297 = smul.addr %s34, 2
          %s298 = sadd.s32 %s35, %s297
          %s299 = smul.addr %s298, 64
          %s300 = scalar_lea.hbm %s0, %s299
          %s302 = sshll.u32 %s293, 4
          %s303 = int_to_ptr.vmem [resolvable:$true] %s302
          %305 = dma.hbm_to_vmem [thread:$0]  %s300, 64, %s303, %s290
        $region32: #{tpu_custom_call.1} parent=27 // pred_fallthru
          _
        // Predicated region
        $region33: #{tpu_custom_call.1} parent=27 // pred_check
          %p306 = pneg %p89
        $region34: #{tpu_custom_call.1} parent=27 // pred_check_branch
          %308 = sbr.rel (%p306) target = $region36
        $region35: #{tpu_custom_call.1} parent=27 // pred_region
          %s309 = sand.u32 %s27, 1
          %s310 = scalar_lea.sflag [#allocation6], %s309
          %s311 = sand.u32 %s79, 1
          %s312 = smul.addr %s311, 4
          %s313 = scalar_lea.vmem [#allocation5], %s312
          %s315 = ssub.s32 64, 64
          %316 = vsyncadd %s310, %s315
          %s317 = smul.addr %s34, 2
          %s318 = sadd.s32 %s35, %s317
          %s319 = smul.addr %s318, 64
          %s320 = scalar_lea.hbm %s1, %s319
          %s322 = sshll.u32 %s313, 4
          %s323 = int_to_ptr.vmem [resolvable:$true] %s322
          %325 = dma.hbm_to_vmem [thread:$0]  %s320, 64, %s323, %s310
        $region36: #{tpu_custom_call.1} parent=27 // pred_fallthru
          _
      $region28: #{tpu_custom_call.1} parent=5 // pred_fallthru
        _
      %p326 = scmp.le.s32.totalorder 1, %s27
      %p327 = scmp.lt.s32.totalorder %s27, 5
      %p328 = pnand %p326, %p327
      %p329 = pneg %p328
      // Predicated region
      $region37: #{tpu_custom_call.1} parent=5 // pred_check
        _
      $region38: #{tpu_custom_call.1} parent=5 // pred_check_branch
        %331 = sbr.rel (%p328) target = $region40
      $region39: #{tpu_custom_call.1} parent=5 // pred_region
        %s332 = ssub.s32 %s27, 1
        %s333 = sand.u32 %s54, 1
        %s334 = scalar_lea.sflag [#allocation3], %s333
        %s335 = sand.u32 %s54, 1
        %s336 = smul.addr %s335, 4
        %s337 = scalar_lea.vmem [#allocation2], %s336
        // Predicated region
        $region41: #{tpu_custom_call.1} parent=39 // pred_check
          %p338 = pneg %p67
        $region42: #{tpu_custom_call.1} parent=39 // pred_check_branch
          %340 = sbr.rel (%p338) target = $region44
        $region43: #{tpu_custom_call.1} parent=39 // pred_region
          %341 = dma.done %s334, 64
        $region44: #{tpu_custom_call.1} parent=39 // pred_fallthru
          _
        %s342 = sand.u32 %s32, 1
        %s343 = scalar_lea.sflag [#allocation6], %s342
        %s344 = sand.u32 %s82, 1
        %s345 = smul.addr %s344, 4
        %s346 = scalar_lea.vmem [#allocation5], %s345
        // Predicated region
        $region45: #{tpu_custom_call.1} parent=39 // pred_check
          %p347 = pneg %p95
        $region46: #{tpu_custom_call.1} parent=39 // pred_check_branch
          %349 = sbr.rel (%p347) target = $region48
        $region47: #{tpu_custom_call.1} parent=39 // pred_region
          %350 = dma.done %s343, 64
        $region48: #{tpu_custom_call.1} parent=39 // pred_fallthru
          _
        // Predicated region
        $region49: #{tpu_custom_call.1} parent=39 // pred_check
          %p351 = pneg %p116
        $region50: #{tpu_custom_call.1} parent=39 // pred_check_branch
          %353 = sbr.rel (%p351) target = $region52
        $region51: #{tpu_custom_call.1} parent=39 // pred_region
          %354 = dma.done [#allocation6], 64
        $region52: #{tpu_custom_call.1} parent=39 // pred_fallthru
          _
        // Predicated region
        $region53: #{tpu_custom_call.1} parent=39 // pred_check
          %p355 = pneg %p158
        $region54: #{tpu_custom_call.1} parent=39 // pred_check_branch
          %357 = sbr.rel (%p355) target = $region56
        $region55: #{tpu_custom_call.1} parent=39 // pred_region
          %358 = dma.done [#allocation9], 64
        $region56: #{tpu_custom_call.1} parent=39 // pred_fallthru
          _
        %s359 = sand.u32 %s54, 1
        %s360 = scalar_lea.sflag [#allocation3], %s359
        %s361 = sand.u32 %s54, 1
        %s362 = smul.addr %s361, 4
        %s363 = scalar_lea.vmem [#allocation2], %s362
        %p364 = pneg %p67
        %p365 = pneg %p64
        %s366 = sand.u32 %s32, 1
        %s367 = scalar_lea.sflag [#allocation6], %s366
        %s368 = sand.u32 %s82, 1
        %s369 = smul.addr %s368, 4
        %s370 = scalar_lea.vmem [#allocation5], %s369
        %p371 = pneg %p95
        %p372 = pneg %p92
        %p373 = pneg %p116
        %p374 = pneg %p113
        %p375 = pneg %p137
        %p376 = pneg %p134
        %p377 = pneg %p158
        %p378 = pneg %p155
        %p379 = pneg %p186
        %p380 = pneg %p183
        %s381 = sand.u32 %s173, 1
        %s382 = scalar_lea.sflag [#allocation4], %s381
        %s383 = sand.u32 %s173, 1
        %s384 = smul.addr %s383, 4
        %s385 = scalar_lea.vmem [#allocation10], %s384
        %p386 = pneg %p214
        %p387 = pneg %p211
        %s388 = sand.u32 %s32, 1
        %s389 = scalar_lea.sflag [#allocation12], %s388
        %s390 = sand.u32 %s201, 1
        %s391 = smul.addr %s390, 4
        %s392 = scalar_lea.vmem [#allocation11], %s391
        %p393 = pneg %p242
        %p394 = pneg %p239
        %s395 = sand.u32 %s32, 1
        %s396 = scalar_lea.sflag [#allocation12], %s395
        %s397 = sand.u32 %s229, 1
        %s398 = smul.addr %s397, 4
        %s399 = scalar_lea.vmem [#allocation13], %s398
        %v400 = vld [vmem:[%s337] sm:$0xf]
        %v401 = vld [vmem:[%s346] sm:$0xf]
        %v402 = vld [vmem:[#allocation7] sm:$0xf]
        %v403 = vld [vmem:[%s3] sm:$0xf]
        %v404 = vld [vmem:[#allocation8] sm:$0xf]
        %vm405 = vcmask 31744
        %v407 = vsel %vm405, %v402, 0
        %vm409 = vcmask 1043456
        %v411 = vsel %vm409, %v400, 0
        %413 = vmatprep.subr.mxu0 0.0
        %414 = vmatpush1.msra.mxu0 0.0
        %415 = vmatprep.subr.mxu0 0.0
        %416 = vmatpush1.msra.mxu0 0.0
        %417 = vmatprep.subr.mxu0 0.0
        %418 = vmatpush1.msra.mxu0 0.0
        %419 = vmatprep.subr.mxu0 0.0
        %420 = vmatpush1.msra.mxu0 0.0
        %421 = vmatprep.subr.mxu0 0.0
        %422 = vmatpush1.msra.mxu0 0.0
        %423 = vmatprep.subr.mxu0 0.0
        %424 = vmatpush1.msra.mxu0 0.0
        %425 = vmatprep.subr.mxu0 0.0
        %426 = vmatpush1.msra.mxu0 0.0
        %427 = vmatprep.subr.mxu0 0.0
        %428 = vmatpush1.msra.mxu0 0.0
        %429 = vmatprep.subr.mxu0 0.0
        %430 = vmatpush1.msra.mxu0 0.0
        %431 = vmatprep.subr.mxu0 0.0
        %432 = vmatpush1.msra.mxu0 0.0
        %433 = vmatprep.subr.mxu0 0.0
        %434 = vmatpush1.msra.mxu0 0.0
        %435 = vmatprep.subr.mxu0 0.0
        %436 = vmatpush1.msra.mxu0 0.0
        %437 = vmatprep.subr.mxu0 0.0
        %438 = vmatpush1.msra.mxu0 0.0
        %439 = vmatprep.subr.mxu0 0.0
        %440 = vmatpush1.msra.mxu0 0.0
        %441 = vmatprep.subr.mxu0 0.0
        %442 = vmatpush1.msra.mxu0 0.0
        %443 = vmatprep.subr.mxu0 0.0
        %444 = vmatpush1.msra.mxu0 %v411
        %445 = vmatprep.subr.mxu0 0.0
        %446 = vmatpush2.msra.mxu0 0.0
        %447 = vmatprep.subr.mxu0 0.0
        %448 = vmatpush2.msra.mxu0 0.0
        %449 = vmatprep.subr.mxu0 0.0
        %450 = vmatpush2.msra.mxu0 0.0
        %451 = vmatprep.subr.mxu0 0.0
        %452 = vmatpush2.msra.mxu0 0.0
        %453 = vmatprep.subr.mxu0 0.0
        %454 = vmatpush2.msra.mxu0 0.0
        %455 = vmatprep.subr.mxu0 0.0
        %456 = vmatpush2.msra.mxu0 0.0
        %457 = vmatprep.subr.mxu0 0.0
        %458 = vmatpush2.msra.mxu0 0.0
        %459 = vmatprep.subr.mxu0 0.0
        %460 = vmatpush2.msra.mxu0 0.0
        %461 = vmatprep.subr.mxu0 0.0
        %462 = vmatpush2.msra.mxu0 0.0
        %463 = vmatprep.subr.mxu0 0.0
        %464 = vmatpush2.msra.mxu0 0.0
        %465 = vmatprep.subr.mxu0 0.0
        %466 = vmatpush2.msra.mxu0 0.0
        %467 = vmatprep.subr.mxu0 0.0
        %468 = vmatpush2.msra.mxu0 0.0
        %469 = vmatprep.subr.mxu0 0.0
        %470 = vmatpush2.msra.mxu0 0.0
        %471 = vmatprep.subr.mxu0 0.0
        %472 = vmatpush2.msra.mxu0 0.0
        %473 = vmatprep.subr.mxu0 0.0
        %474 = vmatpush2.msra.mxu0 0.0
        %475 = vmatprep.subr.mxu0 0.0
        %476 = vmatpush2.msra.mxu0 0.0
        %477 = vmatprep.mubr.f32.mxu0 0.0
        %478 = vmatmul.mubr.f32.gmra.mxu0 %v407
        %v479 = vpop.f32.mrf.mxu0
        %v480 = vadd.f32 0.0, %v479
        %v481 = vpop.f32.mrf.mxu0
        %482 = vdwg.mxu0
        %483 = vst [vmem:[%s385] sm:$0xf] %v480
        %v485 = vsel %vm405, %v403, 0
        %v488 = vsel %vm409, %v401, 0
        %490 = vmatprep.subr.mxu0 0.0
        %491 = vmatpush1.msra.mxu0 0.0
        %492 = vmatprep.subr.mxu0 0.0
        %493 = vmatpush1.msra.mxu0 0.0
        %494 = vmatprep.subr.mxu0 0.0
        %495 = vmatpush1.msra.mxu0 0.0
        %496 = vmatprep.subr.mxu0 0.0
        %497 = vmatpush1.msra.mxu0 0.0
        %498 = vmatprep.subr.mxu0 0.0
        %499 = vmatpush1.msra.mxu0 0.0
        %500 = vmatprep.subr.mxu0 0.0
        %501 = vmatpush1.msra.mxu0 0.0
        %502 = vmatprep.subr.mxu0 0.0
        %503 = vmatpush1.msra.mxu0 0.0
        %504 = vmatprep.subr.mxu0 0.0
        %505 = vmatpush1.msra.mxu0 0.0
        %506 = vmatprep.subr.mxu0 0.0
        %507 = vmatpush1.msra.mxu0 0.0
        %508 = vmatprep.subr.mxu0 0.0
        %509 = vmatpush1.msra.mxu0 0.0
        %510 = vmatprep.subr.mxu0 0.0
        %511 = vmatpush1.msra.mxu0 0.0
        %512 = vmatprep.subr.mxu0 0.0
        %513 = vmatpush1.msra.mxu0 0.0
        %514 = vmatprep.subr.mxu0 0.0
        %515 = vmatpush1.msra.mxu0 0.0
        %516 = vmatprep.subr.mxu0 0.0
        %517 = vmatpush1.msra.mxu0 0.0
        %518 = vmatprep.subr.mxu0 0.0
        %519 = vmatpush1.msra.mxu0 0.0
        %520 = vmatprep.subr.mxu0 0.0
        %521 = vmatpush1.msra.mxu0 %v488
        %522 = vmatprep.subr.mxu0 0.0
        %523 = vmatpush2.msra.mxu0 0.0
        %524 = vmatprep.subr.mxu0 0.0
        %525 = vmatpush2.msra.mxu0 0.0
        %526 = vmatprep.subr.mxu0 0.0
        %527 = vmatpush2.msra.mxu0 0.0
        %528 = vmatprep.subr.mxu0 0.0
        %529 = vmatpush2.msra.mxu0 0.0
        %530 = vmatprep.subr.mxu0 0.0
        %531 = vmatpush2.msra.mxu0 0.0
        %532 = vmatprep.subr.mxu0 0.0
        %533 = vmatpush2.msra.mxu0 0.0
        %534 = vmatprep.subr.mxu0 0.0
        %535 = vmatpush2.msra.mxu0 0.0
        %536 = vmatprep.subr.mxu0 0.0
        %537 = vmatpush2.msra.mxu0 0.0
        %538 = vmatprep.subr.mxu0 0.0
        %539 = vmatpush2.msra.mxu0 0.0
        %540 = vmatprep.subr.mxu0 0.0
        %541 = vmatpush2.msra.mxu0 0.0
        %542 = vmatprep.subr.mxu0 0.0
        %543 = vmatpush2.msra.mxu0 0.0
        %544 = vmatprep.subr.mxu0 0.0
        %545 = vmatpush2.msra.mxu0 0.0
        %546 = vmatprep.subr.mxu0 0.0
        %547 = vmatpush2.msra.mxu0 0.0
        %548 = vmatprep.subr.mxu0 0.0
        %549 = vmatpush2.msra.mxu0 0.0
        %550 = vmatprep.subr.mxu0 0.0
        %551 = vmatpush2.msra.mxu0 0.0
        %552 = vmatprep.subr.mxu0 0.0
        %553 = vmatpush2.msra.mxu0 0.0
        %554 = vmatprep.mubr.f32.mxu0 0.0
        %555 = vmatmul.mubr.f32.gmra.mxu0 %v485
        %v556 = vpop.f32.mrf.mxu0
        %v557 = vadd.f32 0.0, %v556
        %v558 = vpop.f32.mrf.mxu0
        %559 = vdwg.mxu0
        %560 = vst [vmem:[%s392] sm:$0xf] %v557
        %v562 = vsel %vm405, %v404, 0
        %564 = vmatprep.subr.mxu0 0.0
        %565 = vmatpush1.msra.mxu0 0.0
        %566 = vmatprep.subr.mxu0 0.0
        %567 = vmatpush1.msra.mxu0 0.0
        %568 = vmatprep.subr.mxu0 0.0
        %569 = vmatpush1.msra.mxu0 0.0
        %570 = vmatprep.subr.mxu0 0.0
        %571 = vmatpush1.msra.mxu0 0.0
        %572 = vmatprep.subr.mxu0 0.0
        %573 = vmatpush1.msra.mxu0 0.0
        %574 = vmatprep.subr.mxu0 0.0
        %575 = vmatpush1.msra.mxu0 0.0
        %576 = vmatprep.subr.mxu0 0.0
        %577 = vmatpush1.msra.mxu0 0.0
        %578 = vmatprep.subr.mxu0 0.0
        %579 = vmatpush1.msra.mxu0 0.0
        %580 = vmatprep.subr.mxu0 0.0
        %581 = vmatpush1.msra.mxu0 0.0
        %582 = vmatprep.subr.mxu0 0.0
        %583 = vmatpush1.msra.mxu0 0.0
        %584 = vmatprep.subr.mxu0 0.0
        %585 = vmatpush1.msra.mxu0 0.0
        %586 = vmatprep.subr.mxu0 0.0
        %587 = vmatpush1.msra.mxu0 0.0
        %588 = vmatprep.subr.mxu0 0.0
        %589 = vmatpush1.msra.mxu0 0.0
        %590 = vmatprep.subr.mxu0 0.0
        %591 = vmatpush1.msra.mxu0 0.0
        %592 = vmatprep.subr.mxu0 0.0
        %593 = vmatpush1.msra.mxu0 0.0
        %594 = vmatprep.subr.mxu0 0.0
        %595 = vmatpush1.msra.mxu0 %v488
        %596 = vmatprep.subr.mxu0 0.0
        %597 = vmatpush2.msra.mxu0 0.0
        %598 = vmatprep.subr.mxu0 0.0
        %599 = vmatpush2.msra.mxu0 0.0
        %600 = vmatprep.subr.mxu0 0.0
        %601 = vmatpush2.msra.mxu0 0.0
        %602 = vmatprep.subr.mxu0 0.0
        %603 = vmatpush2.msra.mxu0 0.0
        %604 = vmatprep.subr.mxu0 0.0
        %605 = vmatpush2.msra.mxu0 0.0
        %606 = vmatprep.subr.mxu0 0.0
        %607 = vmatpush2.msra.mxu0 0.0
        %608 = vmatprep.subr.mxu0 0.0
        %609 = vmatpush2.msra.mxu0 0.0
        %610 = vmatprep.subr.mxu0 0.0
        %611 = vmatpush2.msra.mxu0 0.0
        %612 = vmatprep.subr.mxu0 0.0
        %613 = vmatpush2.msra.mxu0 0.0
        %614 = vmatprep.subr.mxu0 0.0
        %615 = vmatpush2.msra.mxu0 0.0
        %616 = vmatprep.subr.mxu0 0.0
        %617 = vmatpush2.msra.mxu0 0.0
        %618 = vmatprep.subr.mxu0 0.0
        %619 = vmatpush2.msra.mxu0 0.0
        %620 = vmatprep.subr.mxu0 0.0
        %621 = vmatpush2.msra.mxu0 0.0
        %622 = vmatprep.subr.mxu0 0.0
        %623 = vmatpush2.msra.mxu0 0.0
        %624 = vmatprep.subr.mxu0 0.0
        %625 = vmatpush2.msra.mxu0 0.0
        %626 = vmatprep.subr.mxu0 0.0
        %627 = vmatpush2.msra.mxu0 0.0
        %628 = vmatprep.mubr.f32.mxu0 0.0
        %629 = vmatmul.mubr.f32.gmra.mxu0 %v562
        %v630 = vpop.f32.mrf.mxu0
        %v631 = vadd.f32 0.0, %v630
        %v632 = vpop.f32.mrf.mxu0
        %633 = vdwg.mxu0
        %634 = vst [vmem:[%s399] sm:$0xf] %v631
        %s635 = sand.u32 %s173, 1
        %s636 = scalar_lea.sflag [#allocation4], %s635
        %s637 = sand.u32 %s173, 1
        %s638 = smul.addr %s637, 4
        %s639 = scalar_lea.vmem [#allocation10], %s638
        %s640 = sand.u32 %s32, 1
        %s641 = scalar_lea.sflag [#allocation12], %s640
        %s642 = sand.u32 %s201, 1
        %s643 = smul.addr %s642, 4
        %s644 = scalar_lea.vmem [#allocation11], %s643
        %s645 = sand.u32 %s32, 1
        %s646 = scalar_lea.sflag [#allocation12], %s645
        %s647 = sand.u32 %s229, 1
        %s648 = smul.addr %s647, 4
        %s649 = scalar_lea.vmem [#allocation13], %s648
        // Predicated region
        $region57: #{tpu_custom_call.1} parent=39 // pred_check
          %p650 = pneg %p183
        $region58: #{tpu_custom_call.1} parent=39 // pred_check_branch
          %652 = sbr.rel (%p650) target = $region60
        $region59: #{tpu_custom_call.1} parent=39 // pred_region
          %s654 = ssub.s32 64, 64
          %655 = vsyncadd %s636, %s654
          %s656 = smul.addr %s36, 2
          %s657 = sadd.s32 %s37, %s656
          %s658 = smul.addr %s657, 64
          %s659 = scalar_lea.hbm %s5, %s658
          %s661 = sshll.u32 %s639, 4
          %s662 = int_to_ptr.vmem [resolvable:$true] %s661
          %664 = dma.vmem_to_hbm [thread:$0]  %s662, 64, %s659, %s636
        $region60: #{tpu_custom_call.1} parent=39 // pred_fallthru
          _
        // Predicated region
        $region61: #{tpu_custom_call.1} parent=39 // pred_check
          %p665 = pneg %p211
        $region62: #{tpu_custom_call.1} parent=39 // pred_check_branch
          %667 = sbr.rel (%p665) target = $region64
        $region63: #{tpu_custom_call.1} parent=39 // pred_region
          %s669 = ssub.s32 64, 64
          %670 = vsyncadd %s641, %s669
          %s671 = smul.addr %s36, 2
          %s672 = sadd.s32 %s37, %s671
          %s673 = smul.addr %s672, 64
          %s674 = scalar_lea.hbm %s6, %s673
          %s676 = sshll.u32 %s644, 4
          %s677 = int_to_ptr.vmem [resolvable:$true] %s676
          %679 = dma.vmem_to_hbm [thread:$0]  %s677, 64, %s674, %s641
        $region64: #{tpu_custom_call.1} parent=39 // pred_fallthru
          _
        // Predicated region
        $region65: #{tpu_custom_call.1} parent=39 // pred_check
          %p680 = pneg %p239
        $region66: #{tpu_custom_call.1} parent=39 // pred_check_branch
          %682 = sbr.rel (%p680) target = $region68
        $region67: #{tpu_custom_call.1} parent=39 // pred_region
          %s684 = ssub.s32 64, 64
          %685 = vsyncadd %s646, %s684
          %s686 = smul.addr %s36, 2
          %s687 = sadd.s32 %s37, %s686
          %s688 = smul.addr %s687, 64
          %s689 = scalar_lea.hbm %s7, %s688
          %s691 = sshll.u32 %s649, 4
          %s692 = int_to_ptr.vmem [resolvable:$true] %s691
          %694 = dma.vmem_to_hbm [thread:$0]  %s692, 64, %s689, %s646
        $region68: #{tpu_custom_call.1} parent=39 // pred_fallthru
          _
      $region40: #{tpu_custom_call.1} parent=5 // pred_fallthru
        _
      %p695 = scmp.le.s32.totalorder 2, %s27
      // Predicated region
      $region69: #{tpu_custom_call.1} parent=5 // pred_check
        %p696 = pneg %p695
      $region70: #{tpu_custom_call.1} parent=5 // pred_check_branch
        %698 = sbr.rel (%p696) target = $region72
      $region71: #{tpu_custom_call.1} parent=5 // pred_region
        %s699 = ssub.s32 %s27, 2
        // Predicated region
        $region73: #{tpu_custom_call.1} parent=71 // pred_check
          %p700 = pneg %p189
        $region74: #{tpu_custom_call.1} parent=71 // pred_check_branch
          %702 = sbr.rel (%p700) target = $region76
        $region75: #{tpu_custom_call.1} parent=71 // pred_region
          %s703 = sand.u32 %s174, 1
          %s704 = scalar_lea.sflag [#allocation4], %s703
          %s705 = sand.u32 %s174, 1
          %s706 = smul.addr %s705, 4
          %s707 = scalar_lea.vmem [#allocation10], %s706
          %708 = dma.done %s704, 64
        $region76: #{tpu_custom_call.1} parent=71 // pred_fallthru
          _
        // Predicated region
        $region77: #{tpu_custom_call.1} parent=71 // pred_check
          %p709 = pneg %p217
        $region78: #{tpu_custom_call.1} parent=71 // pred_check_branch
          %711 = sbr.rel (%p709) target = $region80
        $region79: #{tpu_custom_call.1} parent=71 // pred_region
          %s712 = sand.u32 %s33, 1
          %s713 = scalar_lea.sflag [#allocation12], %s712
          %s714 = sand.u32 %s202, 1
          %s715 = smul.addr %s714, 4
          %s716 = scalar_lea.vmem [#allocation11], %s715
          %717 = dma.done %s713, 64
        $region80: #{tpu_custom_call.1} parent=71 // pred_fallthru
          _
        // Predicated region
        $region81: #{tpu_custom_call.1} parent=71 // pred_check
          %p718 = pneg %p245
        $region82: #{tpu_custom_call.1} parent=71 // pred_check_branch
          %720 = sbr.rel (%p718) target = $region84
        $region83: #{tpu_custom_call.1} parent=71 // pred_region
          %s721 = sand.u32 %s33, 1
          %s722 = scalar_lea.sflag [#allocation12], %s721
          %s723 = sand.u32 %s230, 1
          %s724 = smul.addr %s723, 4
          %s725 = scalar_lea.vmem [#allocation13], %s724
          %726 = dma.done %s722, 64
        $region84: #{tpu_custom_call.1} parent=71 // pred_fallthru
          _
      $region72: #{tpu_custom_call.1} parent=5 // pred_fallthru
        _
    $region6: #{tpu_custom_call.1} parent=1 // loop_footer
      %s31 = sadd.s32 1, %s27
    $region7: #{tpu_custom_call.1} parent=1 // loop_footer_branch
      %26 = sbr.rel target = $region3
    $region8: #{tpu_custom_call.1} parent=1 // loop_exit
      _
    %727 = vsyncpa [#allocation3], 1
    %s728 = scalar_lea.sflag [#allocation3], 1
    %729 = vsyncpa %s728, 1
    %730 = vsyncpa [#allocation6], 1
    %s731 = scalar_lea.sflag [#allocation6], 1
    %732 = vsyncpa %s731, 1
    %733 = vsyncpa [#allocation9], 1
    %734 = vsyncpa [#allocation4], 1
    %s735 = scalar_lea.sflag [#allocation4], 1
    %736 = vsyncpa %s735, 1
    %737 = vsyncpa [#allocation12], 1
    %s738 = scalar_lea.sflag [#allocation12], 1
    %739 = vsyncpa %s738, 1

</llo_original>
